<compile_context>
chip_gen: v5e
topology: v5e:2x2
jax: 0.10.0
libtpu: 0.0.40
codegen_flags: <defaults>
</compile_context>

<pallas_src>
import jax
import jax.numpy as jnp
from jax.experimental import pallas as pl
from jax.experimental.pallas import tpu as pltpu

_LANE = 128
_SUBLANE = 8
_EPS = 1e-05
# Per-tile-buffer budget. 2-4 MiB tiles hit ~85% of HBM roofline; with in+out
# double-buffered that's ~16 MiB in flight -> safe on v7x's 64 MiB VMEM too.
_TILE_BUDGET_BYTES = 4 * 1024 * 1024


def _frozen_bn_kernel(scale_ref, offset_ref, x_ref, o_ref):
    # scale_ref / offset_ref: (R, 1) float32 (kept f32 for parity with the
    # PyTorch reference even when x is low precision).
    # x_ref / o_ref: (R, T) tile of the flattened (N*C, H*W) tensor.
    x = x_ref[...].astype(jnp.float32)
    o_ref[...] = (x * scale_ref[...] + offset_ref[...]).astype(o_ref.dtype)


def _choose_tile(n_rows, n_lanes, itemsize, budget_bytes):
    """Pick an (R, T) tile: R rows (sublane axis), T lanes.

    Each dim is either a multiple of its hardware granule (8 / 128) or the
    full array extent, so no wrapper-side padding is ever needed; ragged last
    blocks are masked by Pallas.
    """
    budget_elems = max(_SUBLANE * _LANE, budget_bytes // itemsize)

    # Lane tile: take the full extent if it fits with >= 8 rows, otherwise the
    # largest 128-multiple that does (only the final lane tile gets masked).
    lane_cap = max(_LANE, (budget_elems // _SUBLANE) // _LANE * _LANE)
    t = n_lanes if n_lanes <= lane_cap else lane_cap

    # Row tile: fill the remaining budget; multiple of 8 or the full extent.
    r = max(_SUBLANE, (budget_elems // t) // _SUBLANE * _SUBLANE)
    r = n_rows if r >= n_rows else r
    return r, t


def frozen_batch_norm_2d(x, weight, bias, running_mean, running_var,
                         tile_budget_bytes=_TILE_BUDGET_BYTES):
    """Forward of FrozenBatchNorm2d: y = x * scale + offset (per channel).

    x: (N, C, H, W); weight/bias/running_mean/running_var: (C,).
    """
    N, C, H, W = x.shape
    NC, HW = N * C, H * W
    itemsize = x.dtype.itemsize

    # Fold the frozen statistics into per-channel scale/offset (tiny (C,) math,
    # plain JAX glue), replicate across the batch so the kernel can index them
    # with the same row map as x. Kept in float32.
    scale = weight.astype(jnp.float32) * jax.lax.rsqrt(
        running_var.astype(jnp.float32) + _EPS)
    offset = bias.astype(jnp.float32) - running_mean.astype(jnp.float32) * scale
    scale_rows = jnp.tile(scale, N).reshape(NC, 1)    # row n*C+c -> scale[c]
    offset_rows = jnp.tile(offset, N).reshape(NC, 1)

    # Zero-copy view: (N, C, H, W) -> (N*C, H*W). No pad / slice round-trips.
    x2 = x.reshape(NC, HW)

    R, T = _choose_tile(NC, HW, itemsize, tile_budget_bytes)
    grid = (pl.cdiv(NC, R), pl.cdiv(HW, T))

    cost = pl.CostEstimate(
        flops=2 * NC * HW,
        transcendentals=0,
        bytes_accessed=2 * NC * HW * itemsize + 2 * NC * 4,
    )

    out = pl.pallas_call(
        _frozen_bn_kernel,
        out_shape=jax.ShapeDtypeStruct((NC, HW), x.dtype),
        grid_spec=pltpu.PrefetchScalarGridSpec(
            num_scalar_prefetch=0,
            grid=grid,
            in_specs=[
                pl.BlockSpec((R, 1), lambda r, t: (r, 0)),   # scale rows (f32)
                pl.BlockSpec((R, 1), lambda r, t: (r, 0)),   # offset rows (f32)
                pl.BlockSpec((R, T), lambda r, t: (r, t)),   # x tile
            ],
            out_specs=pl.BlockSpec((R, T), lambda r, t: (r, t)),
        ),
        compiler_params=pltpu.CompilerParams(
            # Both axes independent -> either can be sharded across the 2 TCs
            # of a megacore/v7x chip.
            dimension_semantics=("parallel", "parallel"),
            # ~16 MiB actually in flight; 48 MiB cap leaves headroom and stays
            # inside v7x's 64 MiB physical VMEM.
            vmem_limit_bytes=48 * 1024 * 1024,
        ),
        cost_estimate=cost,
    )(scale_rows, offset_rows, x2)

    return out.reshape(N, C, H, W)


def _reference(x, w, b, rm, rv):
    scale = (w * jax.lax.rsqrt(rv + _EPS)).reshape(1, -1, 1, 1)
    bias = b.reshape(1, -1, 1, 1) - rm.reshape(1, -1, 1, 1) * scale
    return x * scale + bias


if __name__ == "__main__":
    key = jax.random.PRNGKey(0)

    # ---- Test 1: module-implied small shape (N=2, C=4, H=W=16) -------------
    N, C, H, W = 2, 4, 16, 16
    k_x, k_w, k_b, k_rm, k_rv = jax.random.split(key, 5)
    x = jax.random.normal(k_x, (N, C, H, W), dtype=jnp.float32)
    # Deterministic "frozen" parameters (init is ones/zeros; perturb so the
    # affine transform is non-trivial).
    weight = jnp.ones((C,), jnp.float32) + 0.1 * jax.random.normal(k_w, (C,), jnp.float32)
    bias = 0.1 * jax.random.normal(k_b, (C,), jnp.float32)
    running_mean = 0.1 * jax.random.normal(k_rm, (C,), jnp.float32)
    running_var = jnp.ones((C,), jnp.float32) + 0.05 * jnp.abs(
        jax.random.normal(k_rv, (C,), jnp.float32))

    y = jax.block_until_ready(
        frozen_batch_norm_2d(x, weight, bias, running_mean, running_var))
    y_ref = _reference(x, weight, bias, running_mean, running_var)
    assert y.shape == x.shape and y.dtype == x.dtype
    assert jnp.allclose(y, y_ref, atol=1e-5, rtol=1e-5)

    # ---- Test 2: H*W not a multiple of 128 (no pad path, full-extent lanes) -
    N2, C2, H2, W2 = 2, 8, 14, 14
    k2 = jax.random.split(key, 2)[1]
    x2 = jax.random.normal(k2, (N2, C2, H2, W2), dtype=jnp.float32)
    w2 = jnp.ones((C2,), jnp.float32)
    b2 = jnp.zeros((C2,), jnp.float32)
    rm2 = 0.05 * jnp.arange(C2, dtype=jnp.float32)
    rv2 = jnp.ones((C2,), jnp.float32) + 0.01 * jnp.arange(C2, dtype=jnp.float32)
    y2 = jax.block_until_ready(frozen_batch_norm_2d(x2, w2, b2, rm2, rv2))
    assert jnp.allclose(y2, _reference(x2, w2, b2, rm2, rv2), atol=1e-5, rtol=1e-5)

    # ---- Test 3: force a multi-step grid with ragged (masked) last blocks ---
    # Tiny tile budget makes R=8, T=128 over (N*C=12, H*W=196): grid (2, 2)
    # with masked tails on both axes — exercises the no-pad ragged path.
    N3, C3, H3, W3 = 2, 6, 14, 14
    k3 = jax.random.split(key, 3)[2]
    x3 = jax.random.normal(k3, (N3, C3, H3, W3), dtype=jnp.float32)
    w3 = jnp.ones((C3,), jnp.float32) + 0.02 * jnp.arange(C3, dtype=jnp.float32)
    b3 = 0.01 * jnp.arange(C3, dtype=jnp.float32)
    rm3 = 0.03 * jnp.arange(C3, dtype=jnp.float32)
    rv3 = jnp.ones((C3,), jnp.float32) + 0.01 * jnp.arange(C3, dtype=jnp.float32)
    y3 = jax.block_until_ready(
        frozen_batch_norm_2d(x3, w3, b3, rm3, rv3, tile_budget_bytes=4096))
    assert jnp.allclose(y3, _reference(x3, w3, b3, rm3, rv3), atol=1e-5, rtol=1e-5)

    print("KERNEL_OK")
</pallas_src>

<mosaic_0001>
module attributes {stable_mosaic.version = 11 : i64} {
  func.func @_frozen_bn_kernel(%arg0: i32, %arg1: i32, %arg2: memref<8x1xf32, #tpu.memory_space<vmem>>, %arg3: memref<8x1xf32, #tpu.memory_space<vmem>>, %arg4: memref<8x256xf32, #tpu.memory_space<vmem>>, %arg5: memref<8x256xf32, #tpu.memory_space<vmem>>) attributes {dimension_semantics = [#tpu.dimension_semantics<parallel>, #tpu.dimension_semantics<parallel>], iteration_bounds = array<i64: 1, 1>, scalar_prefetch = 0 : i64, scratch_operands = 0 : i64, tpu.core_type = #tpu.core_type<tc>, window_params = [{transform_indices = @transform_0, window_bounds = array<i64: 8, 1>}, {transform_indices = @transform_1, window_bounds = array<i64: 8, 1>}, {transform_indices = @transform_2, window_bounds = array<i64: 8, 256>}, {transform_indices = @transform_3, window_bounds = array<i64: 8, 256>}]} {
    %c0 = arith.constant 0 : index
    %c0_0 = arith.constant 0 : index
    %0 = vector.load %arg4[%c0, %c0_0] : memref<8x256xf32, #tpu.memory_space<vmem>>, vector<8x256xf32>
    %c0_1 = arith.constant 0 : index
    %c0_2 = arith.constant 0 : index
    %1 = vector.load %arg2[%c0_1, %c0_2] : memref<8x1xf32, #tpu.memory_space<vmem>>, vector<8x1xf32>
    %2 = vector.broadcast %1 : vector<8x1xf32> to vector<8x256xf32>
    %3 = arith.mulf %0, %2 : vector<8x256xf32>
    %c0_3 = arith.constant 0 : index
    %c0_4 = arith.constant 0 : index
    %4 = vector.load %arg3[%c0_3, %c0_4] : memref<8x1xf32, #tpu.memory_space<vmem>>, vector<8x1xf32>
    %5 = vector.broadcast %4 : vector<8x1xf32> to vector<8x256xf32>
    %6 = arith.addf %3, %5 : vector<8x256xf32>
    %c0_5 = arith.constant 0 : index
    %c0_6 = arith.constant 0 : index
    %7 = vector.load %arg5[%c0_5, %c0_6] : memref<8x256xf32, #tpu.memory_space<vmem>>, vector<8x256xf32>
    tpu.vector_store %arg5[%c0_5, %c0_6], %6 {strides = array<i32>} : memref<8x256xf32, #tpu.memory_space<vmem>>, vector<8x256xf32>,
    return
  }
  func.func @transform_0(%arg0: i32, %arg1: i32) -> (i32, i32) {
    %c0_i32 = arith.constant 0 : i32
    %c0_i32_0 = arith.constant 0 : i32
    return %arg0, %c0_i32 : i32, i32
  }
  func.func @transform_1(%arg0: i32, %arg1: i32) -> (i32, i32) {
    %c0_i32 = arith.constant 0 : i32
    %c0_i32_0 = arith.constant 0 : i32
    return %arg0, %c0_i32 : i32, i32
  }
  func.func @transform_2(%arg0: i32, %arg1: i32) -> (i32, i32) {
    %c0_i32 = arith.constant 0 : i32
    return %arg0, %arg1 : i32, i32
  }
  func.func @transform_3(%arg0: i32, %arg1: i32) -> (i32, i32) {
    %c0_i32 = arith.constant 0 : i32
    return %arg0, %arg1 : i32, i32
  }
}

</mosaic_0001>

<llo_original>
// kernel: tpu_custom_call.1
$region0: #{tpu_custom_call.1}
  #allocation0 [shape = 'u32[]', space=smem, size = 0x4, offset = 0x4, fixed_abs, tag = 'smem constant byte address 0x4 - core index']
  #allocation1 [shape = 'u32[72,128]{1,0:T(1,128)}', space=vmem, size = 0x9000, scoped, tag = 'internal scratch']
  %s0 = inlined_call_operand.vmem [shape: f32[8,1], index: 0, kind: input, shape index: {}]
  %s1 = inlined_call_operand.vmem [shape: f32[8,1], index: 1, kind: input, shape index: {}]
  %s2 = inlined_call_operand.vmem [shape: f32[8,256], index: 2, kind: input, shape index: {}]
  %s3 = inlined_call_operand.hbm [shape: f32[8,256], index: 3, kind: output, shape index: {}]
  %s4 = sld [smem:[#allocation0]]
  $region22: #{tpu_custom_call.1} parent=0
    _
  %s6 = ssub.s32 1, %s4
  %s7 = scalar_select 0, %s6, %s4
  $region1: #{tpu_custom_call.1} parent=0
    #allocation2 [shape = 'u8[8192]{0}', space=vmem, size = 0x2000, scoped, tag = 'output window, operand 0, single buffered']
    #allocation3 [shape = 's32[1]{0}', space=sflag, size = 0x4, scoped, tag = 'scoped memory for tpu_custom_call.1']
    %8 = vsyncpa [#allocation3], 0
    // Predicated region
    $region2: #{tpu_custom_call.1} parent=1 // pred_check
      _
    $region3: #{tpu_custom_call.1} parent=1 // pred_check_branch
      %10 = sbr.rel (0) target = $region5
    $region4: #{tpu_custom_call.1} parent=1 // pred_region
      _
    $region5: #{tpu_custom_call.1} parent=1 // pred_fallthru
      _
    // Predicated region
    $region6: #{tpu_custom_call.1} parent=1 // pred_check
      _
    $region7: #{tpu_custom_call.1} parent=1 // pred_check_branch
      %12 = sbr.rel (0) target = $region9
    $region8: #{tpu_custom_call.1} parent=1 // pred_region
      _
    $region9: #{tpu_custom_call.1} parent=1 // pred_fallthru
      _
    // Predicated region
    $region10: #{tpu_custom_call.1} parent=1 // pred_check
      _
    $region11: #{tpu_custom_call.1} parent=1 // pred_check_branch
      %14 = sbr.rel (0) target = $region13
    $region12: #{tpu_custom_call.1} parent=1 // pred_region
      _
    $region13: #{tpu_custom_call.1} parent=1 // pred_fallthru
      _
    %v15 = vld [vmem:[%s2] sm:$0xff]
    %v16 = vld [vmem:[%s2 + $0x8] sm:$0xff]
    %v17 = vld [vmem:[%s0] sm:$0xff]
    %19 = vset.pattern.permute.xlu0 0
    %20 = vperm.xlu0 %19, %v17
    %v21 = vpop.permute.xlu0 %20
    %v23 = vmul.f32 %v15, %v21
    %v24 = vmul.f32 %v16, %v21
    %v25 = vld [vmem:[%s1] sm:$0xff]
    %27 = vset.pattern.permute.xlu0 0
    %28 = vperm.xlu0 %27, %v25
    %v29 = vpop.permute.xlu0 %28
    %v31 = vadd.f32 %v23, %v29
    %v32 = vadd.f32 %v24, %v29
    %33 = vst [vmem:[#allocation2] sm:$0xff] %v31
    %34 = vst [vmem:[#allocation2 + $0x8] sm:$0xff] %v32
    // Predicated region
    $region14: #{tpu_custom_call.1} parent=1 // pred_check
      _
    $region15: #{tpu_custom_call.1} parent=1 // pred_check_branch
      %36 = sbr.rel (0) target = $region17
    $region16: #{tpu_custom_call.1} parent=1 // pred_region
      %38 = vsyncadd [#allocation3], 0
      %s40 = sshll.u32 [#allocation2], 4
      %s41 = int_to_ptr.vmem [resolvable:$true] %s40
      %s42 = sshll.u32 %s3, 4
      %s43 = int_to_ptr.hbm [resolvable:$true] %s42
      %45 = dma.vmem_to_hbm [thread:$0]  %s41, 256, %s43, [#allocation3]
    $region17: #{tpu_custom_call.1} parent=1 // pred_fallthru
      _
    // Predicated region
    $region18: #{tpu_custom_call.1} parent=1 // pred_check
      _
    $region19: #{tpu_custom_call.1} parent=1 // pred_check_branch
      %47 = sbr.rel (0) target = $region21
    $region20: #{tpu_custom_call.1} parent=1 // pred_region
      %49 = dma.done [#allocation3], 256
    $region21: #{tpu_custom_call.1} parent=1 // pred_fallthru
      _
    %50 = vsyncpa [#allocation3], 1

</llo_original>
